<compile_context>
chip_gen: v7x
topology: tpu7x:2x2x1
jax: 0.10.0
libtpu: 0.0.40
codegen_flags: <defaults>
</compile_context>

<pallas_src>
import functools

import jax
import jax.numpy as jnp
from jax.experimental import pallas as pl
from jax.experimental.pallas import tpu as pltpu


def _lora_upsample1d_kernel(x_ref, w_ref, bias_ref, o_ref):
    """Fused 2x ConvTranspose1d (k=4, s=2, p=1) with pre-merged LoRA weight.

    x_ref:    (B_TILE, L+2, Cin)   zero-halo padded input (compute dtype)
    w_ref:    (3*Cin, 2*Cout)      packed merged weight [[W3,0],[W1,W2],[0,W0]]
    bias_ref: (1, 2*Cout)          f32 bias, duplicated for [even | odd]
    o_ref:    (B_TILE, L, 2*Cout)  [even-phase | odd-phase] output slab
    """
    bt, lp2, _ = x_ref.shape
    L = lp2 - 2
    two_cout = o_ref.shape[-1]

    # x_cat = [x[m-1] | x[m] | x[m+1]] per row, all B_TILE elements stacked
    # along the M axis -> a single wide matmul per grid step.
    rows = []
    for b in range(bt):  # bt is static -> unrolled at trace time
        xm1 = x_ref[b, 0:L, :]
        x0 = x_ref[b, 1:L + 1, :]
        xp1 = x_ref[b, 2:L + 2, :]
        rows.append(jnp.concatenate([xm1, x0, xp1], axis=-1))   # (L, 3*Cin)
    x_cat = rows[0] if bt == 1 else jnp.concatenate(rows, axis=0)

    out = jnp.dot(x_cat, w_ref[...], preferred_element_type=jnp.float32)
    out = out + bias_ref[...]                                    # one f32 bias add
    o_ref[...] = out.reshape(bt, L, two_cout).astype(o_ref.dtype)


def lora_upsample1d_forward(x, task_name, params, *, stride=2, padding=1,
                            lora_alpha=1.0, compute_dtype=jnp.bfloat16,
                            b_tile=None):
    """Pallas equivalent of LoRAUpsample1d.forward(x, task_name).

    x: (B, dim, L) float array (PyTorch NCL layout).
    params: {"weight": (dim, dim, K), "bias": (dim,),
             "lora_A": {task: (r, dim)}, "lora_B": {task: (r, dim, K)}}
    Returns (B, dim, 2*L) in x.dtype.
    """
    weight = params["weight"]                        # (Cin, Cout, K)
    bias = params["bias"]                            # (Cout,)
    A = params["lora_A"][task_name]                  # (r, Cin)  task-select is host-side/static
    Blr = params["lora_B"][task_name]                # (r, Cout, K)

    Cin, Cout, K = weight.shape
    Bsz, Cin_x, L = x.shape
    assert Cin_x == Cin
    assert (stride, padding, K) == (2, 1, 4), (
        "kernel specialized to ConvTranspose1d(kernel_size=4, stride=2, padding=1)")
    r = A.shape[0]
    scaling = float(lora_alpha) / float(r)

    # ---- LoRA merge hoisted out of the kernel (batch-independent) ----
    w_eff = weight + scaling * jnp.einsum(
        "rc,rok->cok", A.astype(jnp.float32), Blr.astype(jnp.float32))  # (Cin, Cout, K)

    # Pack taps into one (3*Cin, 2*Cout) matrix:
    #   even[m] = x[m-1]@W3 + x[m]@W1 ;  odd[m] = x[m]@W2 + x[m+1]@W0
    W0, W1, W2, W3 = (w_eff[:, :, k] for k in range(K))
    zeros = jnp.zeros((Cin, Cout), jnp.float32)
    w_pack = jnp.concatenate([
        jnp.concatenate([W3, zeros], axis=1),        # rows hit by x[m-1]
        jnp.concatenate([W1, W2], axis=1),           # rows hit by x[m]
        jnp.concatenate([zeros, W0], axis=1),        # rows hit by x[m+1]
    ], axis=0).astype(compute_dtype)                 # (3*Cin, 2*Cout)

    bias2 = jnp.concatenate([bias, bias]).reshape(1, 2 * Cout).astype(jnp.float32)

    # ---- layout plumbing (cheap XLA ops, outside the hot kernel) ----
    x_t = jnp.transpose(x, (0, 2, 1))                            # (B, L, Cin)
    x_pad = jnp.pad(x_t, ((0, 0), (1, 1), (0, 0))).astype(compute_dtype)

    # Batch tiling: keep >= 2 grid steps (v7x megacore) while amortizing the
    # ~0.35us per-step overhead on single-TC chips.
    if b_tile is None:
        target = max(1, (Bsz + 1) // 2)
        b_tile = 1
        for d in range(target, 0, -1):
            if Bsz % d == 0:
                b_tile = d
                break
    assert Bsz % b_tile == 0

    out_blk = pl.pallas_call(
        _lora_upsample1d_kernel,
        out_shape=jax.ShapeDtypeStruct((Bsz, L, 2 * Cout), x.dtype),
        grid=(Bsz // b_tile,),
        in_specs=[
            pl.BlockSpec((b_tile, L + 2, Cin), lambda i: (i, 0, 0)),
            pl.BlockSpec((3 * Cin, 2 * Cout), lambda i: (0, 0)),
            pl.BlockSpec((1, 2 * Cout), lambda i: (0, 0)),
        ],
        out_specs=pl.BlockSpec((b_tile, L, 2 * Cout), lambda i: (i, 0, 0)),
        compiler_params=pltpu.CompilerParams(
            dimension_semantics=("parallel",),
            vmem_limit_bytes=32 * 1024 * 1024,
        ),
    )(x_pad, w_pack, bias2)

    # Free contiguous reshape interleaves the even/odd phases along length,
    # then transpose back to PyTorch NCL layout.
    return out_blk.reshape(Bsz, 2 * L, Cout).transpose(0, 2, 1)


if __name__ == "__main__":
    key = jax.random.PRNGKey(0)
    Bsz, dim, L = 2, 128, 16          # small but lane-dense (dim = 128)
    K, stride, padding = 4, 2, 1
    r = 8
    lora_alpha = 1.0
    task_names = ("task_a", "task_b")

    keys = jax.random.split(key, 7)
    weight = jax.random.normal(keys[0], (dim, dim, K), jnp.float32) / ((dim * K) ** 0.5)
    bias = jax.random.normal(keys[1], (dim,), jnp.float32) * 0.1
    lora_A, lora_B = {}, {}
    for i, t in enumerate(task_names):
        kA, kB = jax.random.split(keys[2 + i])
        lora_A[t] = jax.random.normal(kA, (r, dim), jnp.float32) * 0.3
        lora_B[t] = jax.random.normal(kB, (r, dim, K), jnp.float32) * 0.3
    x = jax.random.normal(keys[5], (Bsz, dim, L), jnp.float32)

    params = {"weight": weight, "bias": bias, "lora_A": lora_A, "lora_B": lora_B}

    y = lora_upsample1d_forward(x, "task_b", params,
                                stride=stride, padding=padding,
                                lora_alpha=lora_alpha)
    y = jax.block_until_ready(y)
    assert y.shape == (Bsz, dim, 2 * L), y.shape
    assert y.dtype == x.dtype, y.dtype

    # ---- pure-JAX f32 reference: merged-weight transposed conv ----
    scaling = lora_alpha / r
    dW = jnp.einsum("rc,rok->cok", lora_A["task_b"], lora_B["task_b"]) * scaling
    w_eff = weight + dW                                     # (Cin, Cout, K)
    rhs = jnp.flip(w_eff, axis=-1).transpose(1, 0, 2)       # (Cout, Cin, K)
    y_ref = jax.lax.conv_general_dilated(
        x, rhs,
        window_strides=(1,),
        padding=[(K - 1 - padding, K - 1 - padding)],
        lhs_dilation=(stride,),
        rhs_dilation=(1,),
        dimension_numbers=("NCH", "OIH", "NCH"),
        preferred_element_type=jnp.float32,
    ) + bias[None, :, None]

    err = float(jnp.max(jnp.abs(y.astype(jnp.float32) - y_ref)))
    assert err < 3e-2, f"max abs err vs reference: {err}"
    print("KERNEL_OK")
</pallas_src>

<mosaic_0001>
module attributes {stable_mosaic.version = 11 : i64} {
  func.func @_lora_upsample1d_kernel(%arg0: i32, %arg1: memref<1x18x128xbf16, #tpu.memory_space<vmem>>, %arg2: memref<384x256xbf16, #tpu.memory_space<vmem>>, %arg3: memref<1x256xf32, #tpu.memory_space<vmem>>, %arg4: memref<1x16x256xf32, #tpu.memory_space<vmem>>) attributes {dimension_semantics = [#tpu.dimension_semantics<parallel>], iteration_bounds = array<i64: 2>, scalar_prefetch = 0 : i64, scratch_operands = 0 : i64, tpu.core_type = #tpu.core_type<tc>, window_params = [{transform_indices = @transform_0, window_bounds = array<i64: 1, 18, 128>}, {pipeline_mode = #tpu.pipeline_mode<synchronous>, transform_indices = @transform_1, window_bounds = array<i64: 384, 256>}, {pipeline_mode = #tpu.pipeline_mode<synchronous>, transform_indices = @transform_2, window_bounds = array<i64: 1, 256>}, {transform_indices = @transform_3, window_bounds = array<i64: 1, 16, 256>}]} {
    %c0 = arith.constant 0 : index
    %c0_0 = arith.constant 0 : index
    %c0_1 = arith.constant 0 : index
    %0 = vector.load %arg1[%c0, %c0_0, %c0_1] : memref<1x18x128xbf16, #tpu.memory_space<vmem>>, vector<1x16x128xbf16>
    %1 = vector.shape_cast %0 : vector<1x16x128xbf16> to vector<16x128xbf16>
    %c0_2 = arith.constant 0 : index
    %c1 = arith.constant 1 : index
    %c0_3 = arith.constant 0 : index
    %2 = vector.load %arg1[%c0_2, %c1, %c0_3] : memref<1x18x128xbf16, #tpu.memory_space<vmem>>, vector<1x16x128xbf16>
    %3 = vector.shape_cast %2 : vector<1x16x128xbf16> to vector<16x128xbf16>
    %c0_4 = arith.constant 0 : index
    %c2 = arith.constant 2 : index
    %c0_5 = arith.constant 0 : index
    %4 = vector.load %arg1[%c0_4, %c2, %c0_5] : memref<1x18x128xbf16, #tpu.memory_space<vmem>>, vector<1x16x128xbf16>
    %5 = vector.shape_cast %4 : vector<1x16x128xbf16> to vector<16x128xbf16>
    %6 = tpu.concatenate %1, %3, %5 in 1 : vector<16x128xbf16>, vector<16x128xbf16>, vector<16x128xbf16> -> vector<16x384xbf16>
    %c0_6 = arith.constant 0 : index
    %c0_7 = arith.constant 0 : index
    %7 = vector.load %arg2[%c0_6, %c0_7] : memref<384x256xbf16, #tpu.memory_space<vmem>>, vector<384x256xbf16>
    %cst = arith.constant dense<0.000000e+00> : vector<16x256xf32>
    %8 = tpu.matmul %6, %7, %cst {dimension_numbers = #tpu.dot_dimension_numbers<[1], [0], [0], [1], [0, 0, 1, 1], [], []>} : vector<16x384xbf16>, vector<384x256xbf16>, vector<16x256xf32> -> vector<16x256xf32>
    %c0_8 = arith.constant 0 : index
    %c0_9 = arith.constant 0 : index
    %9 = vector.load %arg3[%c0_8, %c0_9] : memref<1x256xf32, #tpu.memory_space<vmem>>, vector<1x256xf32>
    %10 = vector.broadcast %9 : vector<1x256xf32> to vector<16x256xf32>
    %11 = arith.addf %8, %10 : vector<16x256xf32>
    %12 = vector.shape_cast %11 : vector<16x256xf32> to vector<1x16x256xf32>
    %c0_10 = arith.constant 0 : index
    %c0_11 = arith.constant 0 : index
    %c0_12 = arith.constant 0 : index
    %13 = vector.load %arg4[%c0_10, %c0_11, %c0_12] : memref<1x16x256xf32, #tpu.memory_space<vmem>>, vector<1x16x256xf32>
    tpu.vector_store %arg4[%c0_10, %c0_11, %c0_12], %12 {strides = array<i32>} : memref<1x16x256xf32, #tpu.memory_space<vmem>>, vector<1x16x256xf32>,
    return
  }
  func.func @transform_0(%arg0: i32) -> (i32, i32, i32) {
    %c0_i32 = arith.constant 0 : i32
    %c0_i32_0 = arith.constant 0 : i32
    %c0_i32_1 = arith.constant 0 : i32
    return %arg0, %c0_i32, %c0_i32_0 : i32, i32, i32
  }
  func.func @transform_1(%arg0: i32) -> (i32, i32) {
    %c0_i32 = arith.constant 0 : i32
    %c0_i32_0 = arith.constant 0 : i32
    %c0_i32_1 = arith.constant 0 : i32
    return %c0_i32, %c0_i32_0 : i32, i32
  }
  func.func @transform_2(%arg0: i32) -> (i32, i32) {
    %c0_i32 = arith.constant 0 : i32
    %c0_i32_0 = arith.constant 0 : i32
    %c0_i32_1 = arith.constant 0 : i32
    return %c0_i32, %c0_i32_0 : i32, i32
  }
  func.func @transform_3(%arg0: i32) -> (i32, i32, i32) {
    %c0_i32 = arith.constant 0 : i32
    %c0_i32_0 = arith.constant 0 : i32
    %c0_i32_1 = arith.constant 0 : i32
    return %arg0, %c0_i32, %c0_i32_0 : i32, i32, i32
  }
}

</mosaic_0001>

<llo_original>
// kernel: tpu_custom_call.1
$region0: #{tpu_custom_call.1}
  #allocation0 [shape = 'u32[]', space=smem, size = 0x4, offset = 0x4, fixed_abs, tag = 'smem constant byte address 0x4 - core index']
  #allocation1 [shape = 'u32[144,128]{1,0:T(1,128)}', space=vmem, size = 0x12000, scoped, tag = 'internal scratch']
  %s0 = inlined_call_operand.vmem [shape: bf16[2,18,128], index: 0, kind: input, shape index: {}]
  %s1 = inlined_call_operand.hbm [shape: bf16[384,256], index: 1, kind: input, shape index: {}]
  %s2 = inlined_call_operand.vmem [shape: f32[1,256], index: 2, kind: input, shape index: {}]
  %s3 = inlined_call_operand.hbm [shape: f32[2,16,256], index: 3, kind: output, shape index: {}]
  %s4 = sld [smem:[#allocation0]]
  $region49: #{tpu_custom_call.1} parent=0
    _
  %s6 = ssub.s32 1, %s4
  %s7 = scalar_select 0, %s6, %s4
  $region1: #{tpu_custom_call.1} parent=0
    #allocation2 [shape = 'u8[196608]{0}', space=vmem, size = 0x30000, scoped, tag = 'input window, operand 1, single buffered']
    #allocation3 [shape = 's32[2]{0}', space=sflag, size = 0x8, scoped, tag = 'scoped memory for tpu_custom_call.1']
    #allocation4 [shape = 's32[2]{0}', space=sflag, size = 0x8, scoped, tag = 'scoped memory for tpu_custom_call.1']
    #allocation5 [shape = 'u8[32768]{0}', space=vmem, size = 0x8000, scoped, tag = 'output window, operand 0']
    %8 = vsyncpa [#allocation3], 0
    %9 = vsyncpa [#allocation4], 0
    %s10 = scalar_lea.sflag [#allocation4], 1
    %11 = vsyncpa %s10, 0
    loop: start=0, step=1, limit=4
    $region2: #{tpu_custom_call.1} parent=1 // loop_pre_header
      _
    $region3: #{tpu_custom_call.1} parent=1 // loop_header
      %s13 = sphi 0, %s17
      %p14 = scmp.ge.s32.totalorder %s13, 4
      %s23 = sphi 0, %s25
      %s26 = sphi 0, %s23
      %s27 = sphi 0, %s26
      %s43 = sphi 0, %s27
      %s47 = sphi 0, %s47
      %s49 = sphi 0, %s47
      %s50 = sphi 0, %s49
      %s64 = sphi 0, %s50
      %s68 = sphi 0, %s68
      %s70 = sphi 0, %s68
      %s71 = sphi 0, %s70
      %s85 = sphi 0, %s71
      %s91 = sphi 0, %s93
      %s94 = sphi 0, %s91
      %s95 = sphi 0, %s94
      %s111 = sphi 0, %s95
    $region4: #{tpu_custom_call.1} parent=1 // loop_header_branch
      %16 = sbr.rel (%p14) target = $region8
    $region5: #{tpu_custom_call.1} parent=1 // loop_body
      %s18 = ssub.s32 %s13, 1
      %s19 = ssub.s32 %s13, 2
      %s20 = sadd.s32 %s13, 1
      %s21 = ssub.s32 %s13, %s20
      %p22 = scmp.eq.s32.totalorder %s21, 0
      %s24 = sadd.s32 %s23, 1
      %s25 = scalar_select %p22, %s23, %s24
      %p28 = pneg %p22
      %p29 = scmp.eq.s32.totalorder %s13, 1
      %p30 = por %p28, %p29
      %p31 = scmp.ne.s32.totalorder %s23, %s26
      %p32 = scmp.eq.s32.totalorder %s13, 0
      %p33 = por %p31, %p32
      %p34 = scmp.ne.s32.totalorder %s23, %s26
      %p35 = scmp.eq.s32.totalorder %s18, 1
      %p36 = por %p34, %p35
      %p37 = scmp.ne.s32.totalorder %s26, %s27
      %p38 = scmp.eq.s32.totalorder %s18, 0
      %p39 = por %p37, %p38
      %p40 = scmp.ne.s32.totalorder %s26, %s27
      %p41 = scmp.eq.s32.totalorder %s19, 1
      %p42 = por %p40, %p41
      %p44 = scmp.ne.s32.totalorder %s27, %s43
      %p45 = scmp.eq.s32.totalorder %s19, 0
      %p46 = por %p44, %p45
      %s48 = sadd.s32 %s47, 1
      %p51 = scmp.eq.s32.totalorder %s13, 1
      %p52 = scmp.ne.s32.totalorder %s47, %s49
      %p53 = scmp.eq.s32.totalorder %s13, 0
      %p54 = por %p52, %p53
      %p55 = scmp.ne.s32.totalorder %s47, %s49
      %p56 = scmp.eq.s32.totalorder %s18, 1
      %p57 = por %p55, %p56
      %p58 = scmp.ne.s32.totalorder %s49, %s50
      %p59 = scmp.eq.s32.totalorder %s18, 0
      %p60 = por %p58, %p59
      %p61 = scmp.ne.s32.totalorder %s49, %s50
      %p62 = scmp.eq.s32.totalorder %s19, 1
      %p63 = por %p61, %p62
      %p65 = scmp.ne.s32.totalorder %s50, %s64
      %p66 = scmp.eq.s32.totalorder %s19, 0
      %p67 = por %p65, %p66
      %s69 = sadd.s32 %s68, 1
      %p72 = scmp.eq.s32.totalorder %s13, 1
      %p73 = scmp.ne.s32.totalorder %s68, %s70
      %p74 = scmp.eq.s32.totalorder %s13, 0
      %p75 = por %p73, %p74
      %p76 = scmp.ne.s32.totalorder %s68, %s70
      %p77 = scmp.eq.s32.totalorder %s18, 1
      %p78 = por %p76, %p77
      %p79 = scmp.ne.s32.totalorder %s70, %s71
      %p80 = scmp.eq.s32.totalorder %s18, 0
      %p81 = por %p79, %p80
      %p82 = scmp.ne.s32.totalorder %s70, %s71
      %p83 = scmp.eq.s32.totalorder %s19, 1
      %p84 = por %p82, %p83
      %p86 = scmp.ne.s32.totalorder %s71, %s85
      %p87 = scmp.eq.s32.totalorder %s19, 0
      %p88 = por %p86, %p87
      %s89 = ssub.s32 %s13, %s20
      %p90 = scmp.eq.s32.totalorder %s89, 0
      %s92 = sadd.s32 %s91, 1
      %s93 = scalar_select %p90, %s91, %s92
      %p96 = pneg %p90
      %p97 = scmp.eq.s32.totalorder %s13, 1
      %p98 = por %p96, %p97
      %p99 = scmp.ne.s32.totalorder %s91, %s94
      %p100 = scmp.eq.s32.totalorder %s13, 0
      %p101 = por %p99, %p100
      %p102 = scmp.ne.s32.totalorder %s91, %s94
      %p103 = scmp.eq.s32.totalorder %s18, 1
      %p104 = por %p102, %p103
      %p105 = scmp.ne.s32.totalorder %s94, %s95
      %p106 = scmp.eq.s32.totalorder %s18, 0
      %p107 = por %p105, %p106
      %p108 = scmp.ne.s32.totalorder %s94, %s95
      %p109 = scmp.eq.s32.totalorder %s19, 1
      %p110 = por %p108, %p109
      %p112 = scmp.ne.s32.totalorder %s95, %s111
      %p113 = scmp.eq.s32.totalorder %s19, 0
      %p114 = por %p112, %p113
      %p115 = scmp.le.s32.totalorder 1, %s13
      %p116 = scmp.lt.s32.totalorder %s13, 3
      %p117 = pnand %p115, %p116
      %p118 = pneg %p117
      // Predicated region
      $region9: #{tpu_custom_call.1} parent=5 // pred_check
        _
      $region10: #{tpu_custom_call.1} parent=5 // pred_check_branch
        %120 = sbr.rel (%p117) target = $region12
      $region11: #{tpu_custom_call.1} parent=5 // pred_region
        %s121 = ssub.s32 %s13, 1
        // Predicated region
        $region13: #{tpu_custom_call.1} parent=11 // pred_check
          %p122 = pneg %p60
        $region14: #{tpu_custom_call.1} parent=11 // pred_check_branch
          %124 = sbr.rel (%p122) target = $region16
        $region15: #{tpu_custom_call.1} parent=11 // pred_region
          %s126 = ssub.s32 6144, 6144
          %127 = vsyncadd [#allocation3], %s126
          %s128 = sshll.u32 [#allocation2], 4
          %s129 = int_to_ptr.vmem [resolvable:$true] %s128
          %134 = dma.hbm_to_vmem [thread:$0]  %s1, 6144, %s129, [#allocation3], 128, 128, 8
        $region16: #{tpu_custom_call.1} parent=11 // pred_fallthru
          _
        // Predicated region
        $region17: #{tpu_custom_call.1} parent=11 // pred_check
          %p135 = pneg %p81
        $region18: #{tpu_custom_call.1} parent=11 // pred_check_branch
          %137 = sbr.rel (%p135) target = $region20
        $region19: #{tpu_custom_call.1} parent=11 // pred_region
          _
        $region20: #{tpu_custom_call.1} parent=11 // pred_fallthru
          _
      $region12: #{tpu_custom_call.1} parent=5 // pred_fallthru
        _
      %p138 = scmp.lt.s32.totalorder %s13, 2
      // Predicated region
      $region21: #{tpu_custom_call.1} parent=5 // pred_check
        %p139 = pneg %p138
      $region22: #{tpu_custom_call.1} parent=5 // pred_check_branch
        %141 = sbr.rel (%p139) target = $region24
      $region23: #{tpu_custom_call.1} parent=5 // pred_region
        // Predicated region
        $region25: #{tpu_custom_call.1} parent=23 // pred_check
          %p142 = pneg %p33
        $region26: #{tpu_custom_call.1} parent=23 // pred_check_branch
          %144 = sbr.rel (%p142) target = $region28
        $region27: #{tpu_custom_call.1} parent=23 // pred_region
          %p145 = scmp.lt.s32.totalorder %s13, 1
          %s146 = scalar_select %p145, %s13, 1
          %s147 = smul.addr %s146, 3
          %s148 = smul.addr %s147, 4
          %s149 = scalar_lea.vmem %s0, %s148
        $region28: #{tpu_custom_call.1} parent=23 // pred_fallthru
          _
      $region24: #{tpu_custom_call.1} parent=5 // pred_fallthru
        _
      %p150 = scmp.le.s32.totalorder 1, %s13
      %p151 = scmp.lt.s32.totalorder %s13, 3
      %p152 = pnand %p150, %p151
      %p153 = pneg %p152
      // Predicated region
      $region29: #{tpu_custom_call.1} parent=5 // pred_check
        _
      $region30: #{tpu_custom_call.1} parent=5 // pred_check_branch
        %155 = sbr.rel (%p152) target = $region32
      $region31: #{tpu_custom_call.1} parent=5 // pred_region
        %s156 = ssub.s32 %s13, 1
        // Predicated region
        $region33: #{tpu_custom_call.1} parent=31 // pred_check
          %p157 = pneg %p60
        $region34: #{tpu_custom_call.1} parent=31 // pred_check_branch
          %159 = sbr.rel (%p157) target = $region36
        $region35: #{tpu_custom_call.1} parent=31 // pred_region
          %160 = dma.done [#allocation3], 6144
        $region36: #{tpu_custom_call.1} parent=31 // pred_fallthru
          _
        %p161 = scmp.lt.s32.totalorder %s18, 1
        %s162 = scalar_select %p161, %s18, 1
        %s163 = smul.addr %s162, 3
        %s164 = smul.addr %s163, 4
        %s165 = scalar_lea.vmem %s0, %s164
        %p166 = pneg %p39
        %p167 = pneg %p36
        %p168 = pneg %p60
        %p169 = pneg %p57
        %p170 = pneg %p81
        %p171 = pneg %p78
        %p172 = pneg %p107
        %p173 = pneg %p104
        %s174 = sand.u32 %s94, 1
        %s175 = scalar_lea.sflag [#allocation4], %s174
        %s176 = sand.u32 %s94, 1
        %s177 = smul.addr %s176, 32
        %s178 = scalar_lea.vmem [#allocation5], %s177
        %p179 = scmp.lt.s32.totalorder %s18, 1
        %s180 = scalar_select %p179, %s18, 1
        %s181 = smul.addr %s180, 3
        %s182 = smul.addr %s181, 4
        %s183 = scalar_lea.vmem %s0, %s182
        %v185 = vld [vmem:[%s183] sm:$0xf]
        %v186 = vld [vmem:[%s183 + $0x4] sm:$0xf]
        %v187 = vld [vmem:[%s183 + $0x8] sm:$0x1]
        %v188 = vld [vmem:[%s183] sm:$0xe]
        %v191 = vunpack.c.l.b16 %v185
        %v192 = vunpack.c.l.b16 %v186
        %v193 = vpack.c.b16 %v192, %v191
        %v196 = vunpack.c.l.b16 %v187
        %v197 = vpack.c.b16 %v196, %v196
        %vm198 = vsmask.f32 7424
        %v200 = vshrl.u32 %v193, 16
        %v202 = vshll.u32 %v193, 16
        %v204 = vrot.slane %v202, 1
        %v205 = vor.u32 %v200, %v204
        %v207 = vshll.u32 %v197, 16
        %v209 = vrot.slane %v207, 1
        %v210 = vsel %vm198, %v205, %v209
        %v213 = vunpack.c.l.b16 %v188
        %v214 = vpack.c.b16 %v192, %v213
        %vm215 = vcmask 1046528
        %v216 = vrot.slane %v214, 1
        %v217 = vrot.slane %v197, 1
        %v218 = vsel %vm215, %v216, %v217
        %v220 = vld [vmem:[#allocation2] sm:$0xff]
        %v221 = vld [vmem:[#allocation2 + $0x8] sm:$0xff]
        %v222 = vld [vmem:[#allocation2 + $0x10] sm:$0xff]
        %v223 = vld [vmem:[#allocation2 + $0x18] sm:$0xff]
        %v224 = vld [vmem:[#allocation2 + $0x20] sm:$0xff]
        %v225 = vld [vmem:[#allocation2 + $0x28] sm:$0xff]
        %v226 = vld [vmem:[#allocation2 + $0x30] sm:$0xff]
        %v227 = vld [vmem:[#allocation2 + $0x38] sm:$0xff]
        %v228 = vld [vmem:[#allocation2 + $0x40] sm:$0xff]
        %v229 = vld [vmem:[#allocation2 + $0x48] sm:$0xff]
        %v230 = vld [vmem:[#allocation2 + $0x50] sm:$0xff]
        %v231 = vld [vmem:[#allocation2 + $0x58] sm:$0xff]
        %v232 = vld [vmem:[#allocation2 + $0x60] sm:$0xff]
        %v233 = vld [vmem:[#allocation2 + $0x68] sm:$0xff]
        %v234 = vld [vmem:[#allocation2 + $0x70] sm:$0xff]
        %v235 = vld [vmem:[#allocation2 + $0x78] sm:$0xff]
        %v236 = vld [vmem:[#allocation2 + $0x80] sm:$0xff]
        %v237 = vld [vmem:[#allocation2 + $0x88] sm:$0xff]
        %v238 = vld [vmem:[#allocation2 + $0x90] sm:$0xff]
        %v239 = vld [vmem:[#allocation2 + $0x98] sm:$0xff]
        %v240 = vld [vmem:[#allocation2 + $0xa0] sm:$0xff]
        %v241 = vld [vmem:[#allocation2 + $0xa8] sm:$0xff]
        %v242 = vld [vmem:[#allocation2 + $0xb0] sm:$0xff]
        %v243 = vld [vmem:[#allocation2 + $0xb8] sm:$0xff]
        %v244 = vld [vmem:[#allocation2 + $0xc0] sm:$0xff]
        %v245 = vld [vmem:[#allocation2 + $0xc8] sm:$0xff]
        %v246 = vld [vmem:[#allocation2 + $0xd0] sm:$0xff]
        %v247 = vld [vmem:[#allocation2 + $0xd8] sm:$0xff]
        %v248 = vld [vmem:[#allocation2 + $0xe0] sm:$0xff]
        %v249 = vld [vmem:[#allocation2 + $0xe8] sm:$0xff]
        %v250 = vld [vmem:[#allocation2 + $0xf0] sm:$0xff]
        %v251 = vld [vmem:[#allocation2 + $0xf8] sm:$0xff]
        %v252 = vld [vmem:[#allocation2 + $0x100] sm:$0xff]
        %v253 = vld [vmem:[#allocation2 + $0x108] sm:$0xff]
        %v254 = vld [vmem:[#allocation2 + $0x110] sm:$0xff]
        %v255 = vld [vmem:[#allocation2 + $0x118] sm:$0xff]
        %v256 = vld [vmem:[#allocation2 + $0x120] sm:$0xff]
        %v257 = vld [vmem:[#allocation2 + $0x128] sm:$0xff]
        %v258 = vld [vmem:[#allocation2 + $0x130] sm:$0xff]
        %v259 = vld [vmem:[#allocation2 + $0x138] sm:$0xff]
        %v260 = vld [vmem:[#allocation2 + $0x140] sm:$0xff]
        %v261 = vld [vmem:[#allocation2 + $0x148] sm:$0xff]
        %v262 = vld [vmem:[#allocation2 + $0x150] sm:$0xff]
        %v263 = vld [vmem:[#allocation2 + $0x158] sm:$0xff]
        %v264 = vld [vmem:[#allocation2 + $0x160] sm:$0xff]
        %v265 = vld [vmem:[#allocation2 + $0x168] sm:$0xff]
        %v266 = vld [vmem:[#allocation2 + $0x170] sm:$0xff]
        %v267 = vld [vmem:[#allocation2 + $0x178] sm:$0xff]
        %v268 = vld [vmem:[%s2] sm:$0x3]
        %v270 = vlaneseq
        %v271 = vshrl.u32 %v270, 7
        %v272 = vsub.s32 0, %v271
        %v273 = vrot.slane %v268, %v272
        %v274 = vlaneseq
        %v275 = vshrl.u32 %v274, 7
        %v276 = vsub.s32 1, %v275
        %v277 = vrot.slane %v268, %v276
        %v328 = vunpack.c.l.b16 %v220
        %v329 = vunpack.c.h.b16 %v220
        %v330 = vunpack.c.l.b16 %v221
        %v331 = vunpack.c.h.b16 %v221
        %v332 = vunpack.c.l.b16 %v222
        %v333 = vunpack.c.h.b16 %v222
        %v334 = vunpack.c.l.b16 %v223
        %v335 = vunpack.c.h.b16 %v223
        %v336 = vunpack.c.l.b16 %v224
        %v337 = vunpack.c.h.b16 %v224
        %v338 = vunpack.c.l.b16 %v225
        %v339 = vunpack.c.h.b16 %v225
        %v340 = vunpack.c.l.b16 %v226
        %v341 = vunpack.c.h.b16 %v226
        %v342 = vunpack.c.l.b16 %v227
        %v343 = vunpack.c.h.b16 %v227
        %v344 = vunpack.c.l.b16 %v228
        %v345 = vunpack.c.h.b16 %v228
        %v346 = vunpack.c.l.b16 %v229
        %v347 = vunpack.c.h.b16 %v229
        %v348 = vunpack.c.l.b16 %v230
        %v349 = vunpack.c.h.b16 %v230
        %v350 = vunpack.c.l.b16 %v231
        %v351 = vunpack.c.h.b16 %v231
        %v352 = vunpack.c.l.b16 %v232
        %v353 = vunpack.c.h.b16 %v232
        %v354 = vunpack.c.l.b16 %v233
        %v355 = vunpack.c.h.b16 %v233
        %v356 = vunpack.c.l.b16 %v234
        %v357 = vunpack.c.h.b16 %v234
        %v358 = vunpack.c.l.b16 %v235
        %v359 = vunpack.c.h.b16 %v235
        %v360 = vunpack.c.l.b16 %v236
        %v361 = vunpack.c.h.b16 %v236
        %v362 = vunpack.c.l.b16 %v237
        %v363 = vunpack.c.h.b16 %v237
        %v364 = vunpack.c.l.b16 %v238
        %v365 = vunpack.c.h.b16 %v238
        %v366 = vunpack.c.l.b16 %v239
        %v367 = vunpack.c.h.b16 %v239
        %v368 = vunpack.c.l.b16 %v240
        %v369 = vunpack.c.h.b16 %v240
        %v370 = vunpack.c.l.b16 %v241
        %v371 = vunpack.c.h.b16 %v241
        %v372 = vunpack.c.l.b16 %v242
        %v373 = vunpack.c.h.b16 %v242
        %v374 = vunpack.c.l.b16 %v243
        %v375 = vunpack.c.h.b16 %v243
        %v376 = vunpack.c.l.b16 %v244
        %v377 = vunpack.c.h.b16 %v244
        %v378 = vunpack.c.l.b16 %v245
        %v379 = vunpack.c.h.b16 %v245
        %v380 = vunpack.c.l.b16 %v246
        %v381 = vunpack.c.h.b16 %v246
        %v382 = vunpack.c.l.b16 %v247
        %v383 = vunpack.c.h.b16 %v247
        %v384 = vunpack.c.l.b16 %v248
        %v385 = vunpack.c.h.b16 %v248
        %v386 = vunpack.c.l.b16 %v249
        %v387 = vunpack.c.h.b16 %v249
        %v388 = vunpack.c.l.b16 %v250
        %v389 = vunpack.c.h.b16 %v250
        %v390 = vunpack.c.l.b16 %v251
        %v391 = vunpack.c.h.b16 %v251
        %v392 = vunpack.c.l.b16 %v252
        %v393 = vunpack.c.h.b16 %v252
        %v394 = vunpack.c.l.b16 %v253
        %v395 = vunpack.c.h.b16 %v253
        %v396 = vunpack.c.l.b16 %v254
        %v397 = vunpack.c.h.b16 %v254
        %v398 = vunpack.c.l.b16 %v255
        %v399 = vunpack.c.h.b16 %v255
        %v400 = vunpack.c.l.b16 %v256
        %v401 = vunpack.c.h.b16 %v256
        %v402 = vunpack.c.l.b16 %v257
        %v403 = vunpack.c.h.b16 %v257
        %v404 = vunpack.c.l.b16 %v258
        %v405 = vunpack.c.h.b16 %v258
        %v406 = vunpack.c.l.b16 %v259
        %v407 = vunpack.c.h.b16 %v259
        %v408 = vunpack.c.l.b16 %v260
        %v409 = vunpack.c.h.b16 %v260
        %v410 = vunpack.c.l.b16 %v261
        %v411 = vunpack.c.h.b16 %v261
        %v412 = vunpack.c.l.b16 %v262
        %v413 = vunpack.c.h.b16 %v262
        %v414 = vunpack.c.l.b16 %v263
        %v415 = vunpack.c.h.b16 %v263
        %v416 = vunpack.c.l.b16 %v264
        %v417 = vunpack.c.h.b16 %v264
        %v418 = vunpack.c.l.b16 %v265
        %v419 = vunpack.c.h.b16 %v265
        %v420 = vunpack.c.l.b16 %v266
        %v421 = vunpack.c.h.b16 %v266
        %v422 = vunpack.c.l.b16 %v267
        %v423 = vunpack.c.h.b16 %v267
        %v424 = vpack.c.b16 %v330, %v328
        %v425 = vpack.c.b16 %v331, %v329
        %v426 = vpack.c.b16 %v334, %v332
        %v427 = vpack.c.b16 %v335, %v333
        %v428 = vpack.c.b16 %v338, %v336
        %v429 = vpack.c.b16 %v339, %v337
        %v430 = vpack.c.b16 %v342, %v340
        %v431 = vpack.c.b16 %v343, %v341
        %v432 = vpack.c.b16 %v346, %v344
        %v433 = vpack.c.b16 %v347, %v345
        %v434 = vpack.c.b16 %v350, %v348
        %v435 = vpack.c.b16 %v351, %v349
        %v436 = vpack.c.b16 %v354, %v352
        %v437 = vpack.c.b16 %v355, %v353
        %v438 = vpack.c.b16 %v358, %v356
        %v439 = vpack.c.b16 %v359, %v357
        %v440 = vpack.c.b16 %v362, %v360
        %v441 = vpack.c.b16 %v363, %v361
        %v442 = vpack.c.b16 %v366, %v364
        %v443 = vpack.c.b16 %v367, %v365
        %v444 = vpack.c.b16 %v370, %v368
        %v445 = vpack.c.b16 %v371, %v369
        %v446 = vpack.c.b16 %v374, %v372
        %v447 = vpack.c.b16 %v375, %v373
        %v448 = vpack.c.b16 %v378, %v376
        %v449 = vpack.c.b16 %v379, %v377
        %v450 = vpack.c.b16 %v382, %v380
        %v451 = vpack.c.b16 %v383, %v381
        %v452 = vpack.c.b16 %v386, %v384
        %v453 = vpack.c.b16 %v387, %v385
        %v454 = vpack.c.b16 %v390, %v388
        %v455 = vpack.c.b16 %v391, %v389
        %v456 = vpack.c.b16 %v394, %v392
        %v457 = vpack.c.b16 %v395, %v393
        %v458 = vpack.c.b16 %v398, %v396
        %v459 = vpack.c.b16 %v399, %v397
        %v460 = vpack.c.b16 %v402, %v400
        %v461 = vpack.c.b16 %v403, %v401
        %v462 = vpack.c.b16 %v406, %v404
        %v463 = vpack.c.b16 %v407, %v405
        %v464 = vpack.c.b16 %v410, %v408
        %v465 = vpack.c.b16 %v411, %v409
        %v466 = vpack.c.b16 %v414, %v412
        %v467 = vpack.c.b16 %v415, %v413
        %v468 = vpack.c.b16 %v418, %v416
        %v469 = vpack.c.b16 %v419, %v417
        %v470 = vpack.c.b16 %v422, %v420
        %v471 = vpack.c.b16 %v423, %v421
        %520 = vmatprep.subr.bf16.mxu0 %v425
        %521 = vmatpush1.bf16.msra.mxu0 %v424
        %522 = vmatprep.subr.bf16.mxu0 %v427
        %523 = vmatpush1.bf16.msra.mxu0 %v426
        %524 = vmatprep.subr.bf16.mxu0 %v429
        %525 = vmatpush1.bf16.msra.mxu0 %v428
        %526 = vmatprep.subr.bf16.mxu0 %v431
        %527 = vmatpush1.bf16.msra.mxu0 %v430
        %528 = vmatprep.subr.bf16.mxu0 %v433
        %529 = vmatpush1.bf16.msra.mxu0 %v432
        %530 = vmatprep.subr.bf16.mxu0 %v435
        %531 = vmatpush1.bf16.msra.mxu0 %v434
        %532 = vmatprep.subr.bf16.mxu0 %v437
        %533 = vmatpush1.bf16.msra.mxu0 %v436
        %534 = vmatprep.subr.bf16.mxu0 %v439
        %535 = vmatpush1.bf16.msra.mxu0 %v438
        %536 = vmatprep.subr.bf16.mxu0 %v441
        %537 = vmatpush1.bf16.msra.mxu0 %v440
        %538 = vmatprep.subr.bf16.mxu0 %v443
        %539 = vmatpush1.bf16.msra.mxu0 %v442
        %540 = vmatprep.subr.bf16.mxu0 %v445
        %541 = vmatpush1.bf16.msra.mxu0 %v444
        %542 = vmatprep.subr.bf16.mxu0 %v447
        %543 = vmatpush1.bf16.msra.mxu0 %v446
        %544 = vmatprep.subr.bf16.mxu0 %v449
        %545 = vmatpush1.bf16.msra.mxu0 %v448
        %546 = vmatprep.subr.bf16.mxu0 %v451
        %547 = vmatpush1.bf16.msra.mxu0 %v450
        %548 = vmatprep.subr.bf16.mxu0 %v453
        %549 = vmatpush1.bf16.msra.mxu0 %v452
        %550 = vmatprep.subr.bf16.mxu0 %v455
        %551 = vmatpush1.bf16.msra.mxu0 %v454
        %552 = vmatprep.mubr.bf16.mxu0 %v210
        %553 = vmatmul.mubr.bf16.gmra.mrb[0].mxu0 %v193
        %v554 = vpop.f32.mrb[0].mxu0
        %v555 = vadd.f32 %v273, %v554
        %v556 = vpop.f32.mrb[0].mxu0
        %v557 = vadd.f32 %v277, %v556
        %v558 = vpop.f32.mrb[0].mxu0
        %v559 = vadd.f32 %v273, %v558
        %v560 = vpop.f32.mrb[0].mxu0
        %v561 = vadd.f32 %v277, %v560
        %562 = vdwg.mxu0
        %563 = vmatprep.subr.bf16.mxu0 %v457
        %564 = vmatpush1.bf16.msra.mxu0 %v456
        %565 = vmatprep.subr.bf16.mxu0 %v459
        %566 = vmatpush1.bf16.msra.mxu0 %v458
        %567 = vmatprep.subr.bf16.mxu0 %v461
        %568 = vmatpush1.bf16.msra.mxu0 %v460
        %569 = vmatprep.subr.bf16.mxu0 %v463
        %570 = vmatpush1.bf16.msra.mxu0 %v462
        %571 = vmatprep.subr.bf16.mxu0 %v465
        %572 = vmatpush1.bf16.msra.mxu0 %v464
        %573 = vmatprep.subr.bf16.mxu0 %v467
        %574 = vmatpush1.bf16.msra.mxu0 %v466
        %575 = vmatprep.subr.bf16.mxu0 %v469
        %576 = vmatpush1.bf16.msra.mxu0 %v468
        %577 = vmatprep.subr.bf16.mxu0 %v471
        %578 = vmatpush1.bf16.msra.mxu0 %v470
        %579 = vmatprep.subr.bf16.mxu0 0
        %580 = vmatpush1.bf16.msra.mxu0 0
        %581 = vmatprep.subr.bf16.mxu0 0
        %582 = vmatpush1.bf16.msra.mxu0 0
        %583 = vmatprep.subr.bf16.mxu0 0
        %584 = vmatpush1.bf16.msra.mxu0 0
        %585 = vmatprep.subr.bf16.mxu0 0
        %586 = vmatpush1.bf16.msra.mxu0 0
        %587 = vmatprep.subr.bf16.mxu0 0
        %588 = vmatpush1.bf16.msra.mxu0 0
        %589 = vmatprep.subr.bf16.mxu0 0
        %590 = vmatpush1.bf16.msra.mxu0 0
        %591 = vmatprep.subr.bf16.mxu0 0
        %592 = vmatpush1.bf16.msra.mxu0 0
        %593 = vmatprep.subr.bf16.mxu0 0
        %594 = vmatpush1.bf16.msra.mxu0 0
        %595 = vmatprep.mubr.bf16.mxu0 0
        %596 = vmatmul.mubr.bf16.gmra.mrb[0].mxu0 %v218
        %v597 = vpop.f32.mrb[0].mxu0
        %v598 = vadd.f32 %v555, %v597
        %v599 = vpop.f32.mrb[0].mxu0
        %v600 = vadd.f32 %v557, %v599
        %v601 = vpop.f32.mrb[0].mxu0
        %v602 = vadd.f32 %v559, %v601
        %v603 = vpop.f32.mrb[0].mxu0
        %v604 = vadd.f32 %v561, %v603
        %605 = vdwg.mxu0
        %606 = vst [vmem:[%s178] sm:$0xff] %v598
        %607 = vst [vmem:[%s178 + $0x8] sm:$0xff] %v600
        %608 = vst [vmem:[%s178 + $0x10] sm:$0xff] %v602
        %609 = vst [vmem:[%s178 + $0x18] sm:$0xff] %v604
        %s610 = sand.u32 %s94, 1
        %s611 = scalar_lea.sflag [#allocation4], %s610
        %s612 = sand.u32 %s94, 1
        %s613 = smul.addr %s612, 32
        %s614 = scalar_lea.vmem [#allocation5], %s613
        // Predicated region
        $region37: #{tpu_custom_call.1} parent=31 // pred_check
          %p615 = pneg %p104
        $region38: #{tpu_custom_call.1} parent=31 // pred_check_branch
          %617 = sbr.rel (%p615) target = $region40
        $region39: #{tpu_custom_call.1} parent=31 // pred_region
          %s619 = ssub.s32 512, 512
          %620 = vsyncadd %s611, %s619
          %s621 = smul.addr %s18, 4
          %s622 = smul.addr %s621, 128
          %s623 = scalar_lea.hbm %s3, %s622
          %s624 = sshll.u32 %s614, 4
          %s625 = int_to_ptr.vmem [resolvable:$true] %s624
          %630 = dma.vmem_to_hbm [thread:$0]  %s625, 512, %s623, %s611, 256, 256, 16
        $region40: #{tpu_custom_call.1} parent=31 // pred_fallthru
          _
      $region32: #{tpu_custom_call.1} parent=5 // pred_fallthru
        _
      %p631 = scmp.le.s32.totalorder 2, %s13
      // Predicated region
      $region41: #{tpu_custom_call.1} parent=5 // pred_check
        %p632 = pneg %p631
      $region42: #{tpu_custom_call.1} parent=5 // pred_check_branch
        %634 = sbr.rel (%p632) target = $region44
      $region43: #{tpu_custom_call.1} parent=5 // pred_region
        %s635 = ssub.s32 %s13, 2
        // Predicated region
        $region45: #{tpu_custom_call.1} parent=43 // pred_check
          %p636 = pneg %p110
        $region46: #{tpu_custom_call.1} parent=43 // pred_check_branch
          %638 = sbr.rel (%p636) target = $region48
        $region47: #{tpu_custom_call.1} parent=43 // pred_region
          %s639 = sand.u32 %s95, 1
          %s640 = scalar_lea.sflag [#allocation4], %s639
          %s641 = sand.u32 %s95, 1
          %s642 = smul.addr %s641, 32
          %s643 = scalar_lea.vmem [#allocation5], %s642
          %644 = dma.done %s640, 512
        $region48: #{tpu_custom_call.1} parent=43 // pred_fallthru
          _
      $region44: #{tpu_custom_call.1} parent=5 // pred_fallthru
        _
    $region6: #{tpu_custom_call.1} parent=1 // loop_footer
      %s17 = sadd.s32 1, %s13
    $region7: #{tpu_custom_call.1} parent=1 // loop_footer_branch
      %12 = sbr.rel target = $region3
    $region8: #{tpu_custom_call.1} parent=1 // loop_exit
      _
    %645 = vsyncpa [#allocation3], 1
    %s646 = scalar_lea.sflag [#allocation3], 1
    %647 = vsyncpa %s646, 1
    %648 = vsyncpa [#allocation4], 1
    %s649 = scalar_lea.sflag [#allocation4], 1
    %650 = vsyncpa %s649, 1

</llo_original>
